<compile_context>
chip_gen: v7x
topology: tpu7x:2x2x1
jax: 0.10.0
libtpu: 0.0.40
codegen_flags: <defaults>
</compile_context>

<pallas_src>
import functools

import jax
import jax.numpy as jnp
from jax.experimental import pallas as pl
from jax.experimental.pallas import tpu as pltpu


def _rmse_kernel(x_ref, y_ref, o_ref, *, inv_b):
    k = pl.program_id(1)                      # batch-tile (reduction) index

    @pl.when(k == 0)
    def _():
        o_ref[...] = jnp.zeros_like(o_ref)

    d = x_ref[...].astype(jnp.float32) - y_ref[...].astype(jnp.float32)
    o_ref[...] += jnp.sum(d * d, axis=0, keepdims=True)

    @pl.when(k == pl.num_programs(1) - 1)
    def _():
        o_ref[...] = o_ref[...] * inv_b


def rmse_loss(x, y, *, f_tile=1024, b_tile=256):
    assert x.shape[0] == y.shape[0]
    assert x.shape == y.shape
    b = x.shape[0]
    trailing = x.shape[1:]
    f = 1
    for s in trailing:
        f *= s

    x2 = x.reshape(b, f)
    y2 = y.reshape(b, f)

    itemsize = jnp.dtype(x2.dtype).itemsize
    sub = max(8, (32 // (itemsize * 8)) * 8)   # 8 (f32) / 16 (bf16) / 32 (i8)

    # Lane tile: multiple of 128, clamped for tiny F; sublane tile: multiple
    # of the packing granularity, clamped for tiny B. Defaults (1024, 256)
    # keep 2 inputs x 2 pipeline buffers well under 64 MiB VMEM on v7x while
    # staying in the ~85% HBM-roofline tile range on v5e/v6e.
    ft = min(f_tile, pl.cdiv(max(f, 1), 128) * 128)
    bt = min(b_tile, pl.cdiv(b, sub) * sub)

    # Pad so tiles divide exactly (remainder-tile handling).
    f_p = pl.cdiv(f, ft) * ft
    b_p = pl.cdiv(b, bt) * bt
    if (b_p, f_p) != (b, f):
        x2 = jnp.pad(x2, ((0, b_p - b), (0, f_p - f)))
        y2 = jnp.pad(y2, ((0, b_p - b), (0, f_p - f)))

    grid = (f_p // ft, b_p // bt)

    # Explicit VMEM budget: 2 inputs x 2 pipeline buffers x (bt, ft) + the
    # double-buffered (1, ft) f32 output + headroom. Sized explicitly so the
    # larger tiles don't trip the default scoped limit (16 MiB v5e / 32 MiB
    # v6e,v7x) and a bad tile choice fails at compile time on v7x (64 MiB).
    vmem_bytes = 2 * 2 * bt * ft * itemsize + 2 * ft * 4 + (4 << 20)
    vmem_bytes = int(min(max(vmem_bytes, 16 << 20), 64 << 20))

    out = pl.pallas_call(
        functools.partial(_rmse_kernel, inv_b=1.0 / b),
        out_shape=jax.ShapeDtypeStruct((1, f_p), jnp.float32),
        grid_spec=pltpu.PrefetchScalarGridSpec(
            num_scalar_prefetch=0,
            grid=grid,
            in_specs=[
                pl.BlockSpec((bt, ft), lambda j, k: (k, j)),
                pl.BlockSpec((bt, ft), lambda j, k: (k, j)),
            ],
            out_specs=pl.BlockSpec((1, ft), lambda j, k: (0, j)),
        ),
        compiler_params=pltpu.CompilerParams(
            dimension_semantics=("parallel", "arbitrary"),
            vmem_limit_bytes=vmem_bytes,
        ),
    )(x2, y2)

    return out[0, :f].reshape(trailing)


if __name__ == "__main__":
    key = jax.random.PRNGKey(0)
    kx, ky = jax.random.split(key)

    # batch=8, trailing feature shape (4, 32) -> output shape (4, 32)
    x = jax.random.normal(kx, (8, 4, 32), dtype=jnp.float32)
    y = jax.random.normal(ky, (8, 4, 32), dtype=jnp.float32)

    loss = rmse_loss(x, y)
    jax.block_until_ready(loss)

    ref = jnp.sum((x - y) ** 2, axis=0) / x.shape[0]
    assert loss.shape == ref.shape
    assert jnp.allclose(loss, ref, atol=1e-5, rtol=1e-5)

    # Second small case exercising the padding / remainder path
    # (B and F not multiples of the tile granularity).
    x2 = jax.random.normal(kx, (6, 5, 7), dtype=jnp.float32)
    y2 = jax.random.normal(ky, (6, 5, 7), dtype=jnp.float32)
    loss2 = rmse_loss(x2, y2)
    jax.block_until_ready(loss2)
    ref2 = jnp.sum((x2 - y2) ** 2, axis=0) / x2.shape[0]
    assert loss2.shape == ref2.shape
    assert jnp.allclose(loss2, ref2, atol=1e-5, rtol=1e-5)

    print("KERNEL_OK")
</pallas_src>

<mosaic_0001>
module attributes {stable_mosaic.version = 11 : i64} {
  func.func @_rmse_kernel(%arg0: i32, %arg1: i32, %arg2: memref<8x128xf32, #tpu.memory_space<vmem>>, %arg3: memref<8x128xf32, #tpu.memory_space<vmem>>, %arg4: memref<1x128xf32, #tpu.memory_space<vmem>>) attributes {dimension_semantics = [#tpu.dimension_semantics<parallel>, #tpu.dimension_semantics<arbitrary>], iteration_bounds = array<i64: 1, 1>, scalar_prefetch = 0 : i64, scratch_operands = 0 : i64, tpu.core_type = #tpu.core_type<tc>, window_params = [{transform_indices = @transform_0, window_bounds = array<i64: 8, 128>}, {transform_indices = @transform_1, window_bounds = array<i64: 8, 128>}, {transform_indices = @transform_2, window_bounds = array<i64: 1, 128>}]} {
    %c0_i32 = arith.constant 0 : i32
    %0 = arith.cmpi eq, %arg1, %c0_i32 : i32
    %1 = arith.extui %0 : i1 to i32
    %c0_i32_0 = arith.constant 0 : i32
    %2 = arith.cmpi ne, %1, %c0_i32_0 : i32
    scf.if %2 {
      %cst_10 = arith.constant 0.000000e+00 : f32
      %15 = vector.broadcast %cst_10 : f32 to vector<1x128xf32>
      %c0_11 = arith.constant 0 : index
      %c0_12 = arith.constant 0 : index
      %16 = vector.load %arg4[%c0_11, %c0_12] : memref<1x128xf32, #tpu.memory_space<vmem>>, vector<1x128xf32>
      tpu.vector_store %arg4[%c0_11, %c0_12], %15 {strides = array<i32>} : memref<1x128xf32, #tpu.memory_space<vmem>>, vector<1x128xf32>,
    } else {
    }
    %c0 = arith.constant 0 : index
    %c0_1 = arith.constant 0 : index
    %3 = vector.load %arg2[%c0, %c0_1] : memref<8x128xf32, #tpu.memory_space<vmem>>, vector<8x128xf32>
    %c0_2 = arith.constant 0 : index
    %c0_3 = arith.constant 0 : index
    %4 = vector.load %arg3[%c0_2, %c0_3] : memref<8x128xf32, #tpu.memory_space<vmem>>, vector<8x128xf32>
    %5 = arith.subf %3, %4 : vector<8x128xf32>
    %c0_4 = arith.constant 0 : index
    %c0_5 = arith.constant 0 : index
    %6 = vector.load %arg4[%c0_4, %c0_5] : memref<1x128xf32, #tpu.memory_space<vmem>>, vector<1x128xf32>
    %7 = arith.mulf %5, %5 : vector<8x128xf32>
    %cst = arith.constant dense<0.000000e+00> : vector<128xf32>
    %8 = vector.multi_reduction <add>, %7, %cst [0] : vector<8x128xf32> to vector<128xf32>
    %9 = vector.shape_cast %8 : vector<128xf32> to vector<1x128xf32>
    %10 = arith.addf %6, %9 : vector<1x128xf32>
    %c0_6 = arith.constant 0 : index
    %c0_7 = arith.constant 0 : index
    %11 = vector.load %arg4[%c0_6, %c0_7] : memref<1x128xf32, #tpu.memory_space<vmem>>, vector<1x128xf32>
    tpu.vector_store %arg4[%c0_6, %c0_7], %10 {strides = array<i32>} : memref<1x128xf32, #tpu.memory_space<vmem>>, vector<1x128xf32>,
    %c0_i32_8 = arith.constant 0 : i32
    %12 = arith.cmpi eq, %arg1, %c0_i32_8 : i32
    %13 = arith.extui %12 : i1 to i32
    %c0_i32_9 = arith.constant 0 : i32
    %14 = arith.cmpi ne, %13, %c0_i32_9 : i32
    scf.if %14 {
      %c0_10 = arith.constant 0 : index
      %c0_11 = arith.constant 0 : index
      %15 = vector.load %arg4[%c0_10, %c0_11] : memref<1x128xf32, #tpu.memory_space<vmem>>, vector<1x128xf32>
      %cst_12 = arith.constant 1.250000e-01 : f32
      %16 = vector.broadcast %cst_12 : f32 to vector<1x128xf32>
      %17 = arith.mulf %15, %16 : vector<1x128xf32>
      %c0_13 = arith.constant 0 : index
      %c0_14 = arith.constant 0 : index
      %18 = vector.load %arg4[%c0_13, %c0_14] : memref<1x128xf32, #tpu.memory_space<vmem>>, vector<1x128xf32>
      tpu.vector_store %arg4[%c0_13, %c0_14], %17 {strides = array<i32>} : memref<1x128xf32, #tpu.memory_space<vmem>>, vector<1x128xf32>,
    } else {
    }
    return
  }
  func.func @transform_0(%arg0: i32, %arg1: i32) -> (i32, i32) {
    %c0_i32 = arith.constant 0 : i32
    return %arg1, %arg0 : i32, i32
  }
  func.func @transform_1(%arg0: i32, %arg1: i32) -> (i32, i32) {
    %c0_i32 = arith.constant 0 : i32
    return %arg1, %arg0 : i32, i32
  }
  func.func @transform_2(%arg0: i32, %arg1: i32) -> (i32, i32) {
    %c0_i32 = arith.constant 0 : i32
    %c0_i32_0 = arith.constant 0 : i32
    return %c0_i32, %arg0 : i32, i32
  }
}

</mosaic_0001>

<llo_original>
// kernel: tpu_custom_call.1
$region0: #{tpu_custom_call.1}
  #allocation0 [shape = 'u32[]', space=smem, size = 0x4, offset = 0x4, fixed_abs, tag = 'smem constant byte address 0x4 - core index']
  #allocation1 [shape = 'u32[144,128]{1,0:T(1,128)}', space=vmem, size = 0x12000, scoped, tag = 'internal scratch']
  %s0 = inlined_call_operand.hbm [shape: f32[8,128], index: 0, kind: input, shape index: {}]
  %s1 = inlined_call_operand.hbm [shape: f32[8,128], index: 1, kind: input, shape index: {}]
  %s2 = inlined_call_operand.hbm [shape: f32[1,128], index: 2, kind: output, shape index: {}]
  %s3 = sld [smem:[#allocation0]]
  $region34: #{tpu_custom_call.1} parent=0
    _
  %s5 = ssub.s32 1, %s3
  %s6 = scalar_select 0, %s5, %s3
  $region1: #{tpu_custom_call.1} parent=0
    #allocation2 [shape = 'u8[4096]{0}', space=vmem, size = 0x1000, scoped, tag = 'input window, operand 0, single buffered']
    #allocation3 [shape = 's32[1]{0}', space=sflag, size = 0x4, scoped, tag = 'scoped memory for tpu_custom_call.1']
    #allocation4 [shape = 's32[1]{0}', space=sflag, size = 0x4, scoped, tag = 'scoped memory for tpu_custom_call.1']
    #allocation5 [shape = 'u8[4096]{0}', space=vmem, size = 0x1000, scoped, tag = 'input window, operand 1, single buffered']
    #allocation6 [shape = 's32[1]{0}', space=sflag, size = 0x4, scoped, tag = 'scoped memory for tpu_custom_call.1']
    #allocation7 [shape = 'u8[512]{0}', space=vmem, size = 0x400, scoped, tag = 'output window, operand 0, single buffered']
    %7 = vsyncpa [#allocation3], 0
    %8 = vsyncpa [#allocation6], 0
    %9 = vsyncpa [#allocation4], 0
    // Predicated region
    $region2: #{tpu_custom_call.1} parent=1 // pred_check
      _
    $region3: #{tpu_custom_call.1} parent=1 // pred_check_branch
      %11 = sbr.rel (0) target = $region5
    $region4: #{tpu_custom_call.1} parent=1 // pred_region
      %s13 = ssub.s32 128, 128
      %14 = vsyncadd [#allocation3], %s13
      %s16 = sshll.u32 [#allocation2], 4
      %s17 = int_to_ptr.vmem [resolvable:$true] %s16
      %19 = dma.hbm_to_vmem [thread:$0]  %s0, 128, %s17, [#allocation3]
    $region5: #{tpu_custom_call.1} parent=1 // pred_fallthru
      _
    // Predicated region
    $region6: #{tpu_custom_call.1} parent=1 // pred_check
      _
    $region7: #{tpu_custom_call.1} parent=1 // pred_check_branch
      %21 = sbr.rel (0) target = $region9
    $region8: #{tpu_custom_call.1} parent=1 // pred_region
      %s23 = ssub.s32 128, 128
      %24 = vsyncadd [#allocation6], %s23
      %s26 = sshll.u32 [#allocation5], 4
      %s27 = int_to_ptr.vmem [resolvable:$true] %s26
      %29 = dma.hbm_to_vmem [thread:$0]  %s1, 128, %s27, [#allocation6]
    $region9: #{tpu_custom_call.1} parent=1 // pred_fallthru
      _
    // Predicated region
    $region10: #{tpu_custom_call.1} parent=1 // pred_check
      _
    $region11: #{tpu_custom_call.1} parent=1 // pred_check_branch
      %31 = sbr.rel (0) target = $region13
    $region12: #{tpu_custom_call.1} parent=1 // pred_region
      %32 = dma.done [#allocation3], 128
    $region13: #{tpu_custom_call.1} parent=1 // pred_fallthru
      _
    // Predicated region
    $region14: #{tpu_custom_call.1} parent=1 // pred_check
      _
    $region15: #{tpu_custom_call.1} parent=1 // pred_check_branch
      %34 = sbr.rel (0) target = $region17
    $region16: #{tpu_custom_call.1} parent=1 // pred_region
      %35 = dma.done [#allocation6], 128
    $region17: #{tpu_custom_call.1} parent=1 // pred_fallthru
      _
    %p36 = scmp.eq.s32.totalorder 0, 0
    // Predicated region
    $region18: #{tpu_custom_call.1} parent=1 // pred_check
      %p37 = pneg %p36
    $region19: #{tpu_custom_call.1} parent=1 // pred_check_branch
      %39 = sbr.rel (%p37) target = $region21
    $region20: #{tpu_custom_call.1} parent=1 // pred_region
      %40 = vst [vmem:[#allocation7] sm:$0x1] 0.0
    $region21: #{tpu_custom_call.1} parent=1 // pred_fallthru
      _
    %v41 = vld [vmem:[#allocation2] sm:$0xff]
    %v42 = vld [vmem:[#allocation5] sm:$0xff]
    %v43 = vsub.f32 %v41, %v42
    %v44 = vld [vmem:[#allocation7] sm:$0x1]
    %v45 = vmul.f32 %v43, %v43
    %v46 = vrot.slane %v45, 4
    %v47 = vadd.f32 %v45, %v46
    %v48 = vrot.slane %v47, 2
    %v49 = vadd.f32 %v47, %v48
    %v50 = vrot.slane %v49, 1
    %v51 = vadd.f32 %v49, %v50
    %v52 = vadd.f32 %v44, %v51
    %53 = vst [vmem:[#allocation7] sm:$0x1] %v52
    // Predicated region
    $region22: #{tpu_custom_call.1} parent=1 // pred_check
      %p54 = pneg %p36
    $region23: #{tpu_custom_call.1} parent=1 // pred_check_branch
      %56 = sbr.rel (%p54) target = $region25
    $region24: #{tpu_custom_call.1} parent=1 // pred_region
      %v57 = vld [vmem:[#allocation7] sm:$0x1]
      %v58 = vmul.f32 %v57, 0.125
      %59 = vst [vmem:[#allocation7] sm:$0x1] %v58
    $region25: #{tpu_custom_call.1} parent=1 // pred_fallthru
      _
    // Predicated region
    $region26: #{tpu_custom_call.1} parent=1 // pred_check
      _
    $region27: #{tpu_custom_call.1} parent=1 // pred_check_branch
      %61 = sbr.rel (0) target = $region29
    $region28: #{tpu_custom_call.1} parent=1 // pred_region
      %s63 = ssub.s32 16, 16
      %64 = vsyncadd [#allocation4], %s63
      %s66 = sshll.u32 [#allocation7], 4
      %s67 = int_to_ptr.vmem [resolvable:$true] %s66
      %69 = dma.vmem_to_hbm [thread:$0]  %s67, 16, %s2, [#allocation4]
    $region29: #{tpu_custom_call.1} parent=1 // pred_fallthru
      _
    // Predicated region
    $region30: #{tpu_custom_call.1} parent=1 // pred_check
      _
    $region31: #{tpu_custom_call.1} parent=1 // pred_check_branch
      %71 = sbr.rel (0) target = $region33
    $region32: #{tpu_custom_call.1} parent=1 // pred_region
      %72 = dma.done [#allocation4], 16
    $region33: #{tpu_custom_call.1} parent=1 // pred_fallthru
      _
    %73 = vsyncpa [#allocation3], 1
    %74 = vsyncpa [#allocation6], 1
    %75 = vsyncpa [#allocation4], 1

</llo_original>
